<compile_context>
chip_gen: v7x
topology: tpu7x:2x2x1
jax: 0.10.0
libtpu: 0.0.40
codegen_flags: <defaults>
</compile_context>

<pallas_src>
import jax
import jax.numpy as jnp
from jax.experimental import pallas as pl
from jax.experimental.pallas import tpu as pltpu

IN_FEATS = 28 * 28   # 784
TB_MAX = 1024        # max batch-tile rows (multiple of 256)


def _cdiv(a, b):
    return (a + b - 1) // b


def _round_up(a, b):
    return _cdiv(a, b) * b


def mlp_kernel(x_ref, w1_ref, b1_ref, w2_ref, b2_ref, w3_ref, b3_ref, o_ref):
    # Cast the streamed f32 x tile to bf16 in VMEM (no extra HBM pass);
    # all matmuls accumulate in f32 on the MXU, activations in f32.
    x_bf = x_ref[...].astype(jnp.bfloat16)

    # fc1 + tanh
    h1 = jnp.tanh(
        jnp.dot(x_bf, w1_ref[...], preferred_element_type=jnp.float32)
        + b1_ref[...]
    )
    # fc2 + tanh
    h2 = jnp.tanh(
        jnp.dot(h1.astype(jnp.bfloat16), w2_ref[...],
                preferred_element_type=jnp.float32)
        + b2_ref[...]
    )
    # fc3 + tanh
    h3 = jnp.tanh(
        jnp.dot(h2.astype(jnp.bfloat16), w3_ref[...],
                preferred_element_type=jnp.float32)
        + b3_ref[...]
    )
    # softmax over the feature axis (PyTorch dim=1 == last axis here),
    # numerically stabilized, exact normalization in f32.
    m = jnp.max(h3, axis=-1, keepdims=True)
    e = jnp.exp(h3 - m)
    o_ref[...] = (e / jnp.sum(e, axis=-1, keepdims=True)).astype(o_ref.dtype)


def net_forward(x, params, *, tb_max=TB_MAX):
    """x: (B, 1, 28, 28) or (B, 784) float32 -> (B, 32) softmax probabilities."""
    w1, b1, w2, b2, w3, b3 = params
    x2 = x.reshape(-1, IN_FEATS).astype(jnp.float32)
    B = x2.shape[0]

    # Tile selection:
    #  - small batch: one tile of round_up(B, 16) rows (no padded-zero tiles)
    #  - large batch: up to tb_max rows per tile; keep the grid length >= 2
    #    so dimension_semantics=("parallel",) can split batch across v7x's
    #    two TensorCores.
    if B <= 256:
        tb = max(16, _round_up(B, 16))
    else:
        tb = min(tb_max, _round_up(_cdiv(B, 2), 256))
    Bp = _round_up(B, tb)
    if Bp != B:
        x2 = jnp.pad(x2, ((0, Bp - B), (0, 0)))

    # Weights are tiny -> cast to bf16 for the MXU; biases stay f32.
    w1_bf = w1.astype(jnp.bfloat16)
    w2_bf = w2.astype(jnp.bfloat16)
    w3_bf = w3.astype(jnp.bfloat16)

    # VMEM-resident arrays: constant index_map, fetched once.
    resident = lambda shape: pl.BlockSpec(shape, lambda i: (0,) * len(shape))

    n_weight_bytes = (IN_FEATS * 128 + 128 * 64 + 64 * 32) * 2 \
        + (128 + 64 + 32) * 4
    cost = pl.CostEstimate(
        flops=2 * Bp * (IN_FEATS * 128 + 128 * 64 + 64 * 32),
        transcendentals=Bp * (128 + 64 + 32 + 32),   # tanh + exp
        bytes_accessed=Bp * IN_FEATS * 4 + Bp * 32 * 4 + n_weight_bytes,
    )

    out = pl.pallas_call(
        mlp_kernel,
        out_shape=jax.ShapeDtypeStruct((Bp, 32), jnp.float32),
        grid_spec=pltpu.PrefetchScalarGridSpec(
            num_scalar_prefetch=0,
            grid=(Bp // tb,),
            in_specs=[
                pl.BlockSpec((tb, IN_FEATS), lambda i: (i, 0)),  # streamed f32 x tile
                resident((IN_FEATS, 128)), resident((1, 128)),   # fc1
                resident((128, 64)), resident((1, 64)),          # fc2
                resident((64, 32)), resident((1, 32)),           # fc3
            ],
            out_specs=pl.BlockSpec((tb, 32), lambda i: (i, 0)),
        ),
        compiler_params=pltpu.CompilerParams(
            dimension_semantics=("parallel",),
            vmem_limit_bytes=32 * 1024 * 1024,
        ),
        cost_estimate=cost,
    )(x2, w1_bf, b1, w2_bf, b2, w3_bf, b3)

    return out[:B]


def init_params(key):
    """Deterministic init mimicking nn.Linear default (uniform +/- 1/sqrt(fan_in)).
    Weights stored as (in_features, out_features) so the kernel computes x @ W + b."""
    dims = [(IN_FEATS, 128), (128, 64), (64, 32)]
    params = []
    for i, (fan_in, fan_out) in enumerate(dims):
        kw, kb = jax.random.split(jax.random.fold_in(key, i))
        bound = 1.0 / (fan_in ** 0.5)
        w = jax.random.uniform(kw, (fan_in, fan_out), jnp.float32, -bound, bound)
        b = jax.random.uniform(kb, (1, fan_out), jnp.float32, -bound, bound)
        params += [w, b]
    # TODO(synk): fc4 (32 -> 10) exists in __init__ but is unused in forward(); omitted.
    return tuple(params)


if __name__ == "__main__":
    key = jax.random.PRNGKey(0)
    k_x, k_p = jax.random.split(key)

    # Small batch of MNIST-shaped inputs (NCHW), flattened inside the wrapper.
    x = jax.random.normal(k_x, (8, 1, 28, 28), dtype=jnp.float32)
    params = init_params(k_p)

    out = net_forward(x, params)
    out = jax.block_until_ready(out)

    # sanity: shape and rows of a softmax sum to 1 (bf16 MXU operands; exact divide)
    assert out.shape == (8, 32)
    assert bool(jnp.allclose(jnp.sum(out, axis=1), 1.0, atol=1e-2))

    print("KERNEL_OK")
</pallas_src>

<mosaic_0001>
module attributes {stable_mosaic.version = 11 : i64} {
  func.func @mlp_kernel(%arg0: i32, %arg1: memref<16x784xf32, #tpu.memory_space<vmem>>, %arg2: memref<784x128xbf16, #tpu.memory_space<vmem>>, %arg3: memref<1x128xf32, #tpu.memory_space<vmem>>, %arg4: memref<128x64xbf16, #tpu.memory_space<vmem>>, %arg5: memref<1x64xf32, #tpu.memory_space<vmem>>, %arg6: memref<64x32xbf16, #tpu.memory_space<vmem>>, %arg7: memref<1x32xf32, #tpu.memory_space<vmem>>, %arg8: memref<16x32xf32, #tpu.memory_space<vmem>>) attributes {dimension_semantics = [#tpu.dimension_semantics<parallel>], iteration_bounds = array<i64: 1>, scalar_prefetch = 0 : i64, scratch_operands = 0 : i64, tpu.core_type = #tpu.core_type<tc>, window_params = [{transform_indices = @transform_0, window_bounds = array<i64: 16, 784>}, {pipeline_mode = #tpu.pipeline_mode<synchronous>, transform_indices = @transform_1, window_bounds = array<i64: 784, 128>}, {pipeline_mode = #tpu.pipeline_mode<synchronous>, transform_indices = @transform_2, window_bounds = array<i64: 1, 128>}, {pipeline_mode = #tpu.pipeline_mode<synchronous>, transform_indices = @transform_3, window_bounds = array<i64: 128, 64>}, {pipeline_mode = #tpu.pipeline_mode<synchronous>, transform_indices = @transform_4, window_bounds = array<i64: 1, 64>}, {pipeline_mode = #tpu.pipeline_mode<synchronous>, transform_indices = @transform_5, window_bounds = array<i64: 64, 32>}, {pipeline_mode = #tpu.pipeline_mode<synchronous>, transform_indices = @transform_6, window_bounds = array<i64: 1, 32>}, {transform_indices = @transform_7, window_bounds = array<i64: 16, 32>}]} {
    %c0 = arith.constant 0 : index
    %c0_0 = arith.constant 0 : index
    %0 = vector.load %arg1[%c0, %c0_0] : memref<16x784xf32, #tpu.memory_space<vmem>>, vector<16x784xf32>
    %1 = arith.truncf %0 : vector<16x784xf32> to vector<16x784xbf16>
    %c0_1 = arith.constant 0 : index
    %c0_2 = arith.constant 0 : index
    %2 = vector.load %arg2[%c0_1, %c0_2] : memref<784x128xbf16, #tpu.memory_space<vmem>>, vector<784x128xbf16>
    %cst = arith.constant dense<0.000000e+00> : vector<16x128xf32>
    %3 = tpu.matmul %1, %2, %cst {dimension_numbers = #tpu.dot_dimension_numbers<[1], [0], [0], [1], [0, 0, 1, 1], [], []>} : vector<16x784xbf16>, vector<784x128xbf16>, vector<16x128xf32> -> vector<16x128xf32>
    %c0_3 = arith.constant 0 : index
    %c0_4 = arith.constant 0 : index
    %4 = vector.load %arg3[%c0_3, %c0_4] : memref<1x128xf32, #tpu.memory_space<vmem>>, vector<1x128xf32>
    %5 = vector.broadcast %4 : vector<1x128xf32> to vector<16x128xf32>
    %6 = arith.addf %3, %5 : vector<16x128xf32>
    %7 = math.tanh %6 : vector<16x128xf32>
    %8 = arith.truncf %7 : vector<16x128xf32> to vector<16x128xbf16>
    %c0_5 = arith.constant 0 : index
    %c0_6 = arith.constant 0 : index
    %9 = vector.load %arg4[%c0_5, %c0_6] : memref<128x64xbf16, #tpu.memory_space<vmem>>, vector<128x64xbf16>
    %cst_7 = arith.constant dense<0.000000e+00> : vector<16x64xf32>
    %10 = tpu.matmul %8, %9, %cst_7 {dimension_numbers = #tpu.dot_dimension_numbers<[1], [0], [0], [1], [0, 0, 1, 1], [], []>} : vector<16x128xbf16>, vector<128x64xbf16>, vector<16x64xf32> -> vector<16x64xf32>
    %c0_8 = arith.constant 0 : index
    %c0_9 = arith.constant 0 : index
    %11 = vector.load %arg5[%c0_8, %c0_9] : memref<1x64xf32, #tpu.memory_space<vmem>>, vector<1x64xf32>
    %12 = vector.broadcast %11 : vector<1x64xf32> to vector<16x64xf32>
    %13 = arith.addf %10, %12 : vector<16x64xf32>
    %14 = math.tanh %13 : vector<16x64xf32>
    %15 = arith.truncf %14 : vector<16x64xf32> to vector<16x64xbf16>
    %c0_10 = arith.constant 0 : index
    %c0_11 = arith.constant 0 : index
    %16 = vector.load %arg6[%c0_10, %c0_11] : memref<64x32xbf16, #tpu.memory_space<vmem>>, vector<64x32xbf16>
    %cst_12 = arith.constant dense<0.000000e+00> : vector<16x32xf32>
    %17 = tpu.matmul %15, %16, %cst_12 {dimension_numbers = #tpu.dot_dimension_numbers<[1], [0], [0], [1], [0, 0, 1, 1], [], []>} : vector<16x64xbf16>, vector<64x32xbf16>, vector<16x32xf32> -> vector<16x32xf32>
    %c0_13 = arith.constant 0 : index
    %c0_14 = arith.constant 0 : index
    %18 = vector.load %arg7[%c0_13, %c0_14] : memref<1x32xf32, #tpu.memory_space<vmem>>, vector<1x32xf32>
    %19 = vector.broadcast %18 : vector<1x32xf32> to vector<16x32xf32>
    %20 = arith.addf %17, %19 : vector<16x32xf32>
    %21 = math.tanh %20 : vector<16x32xf32>
    %cst_15 = arith.constant dense<0xFF800000> : vector<16xf32>
    %22 = vector.multi_reduction <maximumf>, %21, %cst_15 [1] : vector<16x32xf32> to vector<16xf32>
    %23 = vector.shape_cast %22 : vector<16xf32> to vector<16x1xf32>
    %24 = vector.broadcast %23 : vector<16x1xf32> to vector<16x32xf32>
    %25 = arith.subf %21, %24 : vector<16x32xf32>
    %26 = math.exp %25 : vector<16x32xf32>
    %cst_16 = arith.constant dense<0.000000e+00> : vector<16xf32>
    %27 = vector.multi_reduction <add>, %26, %cst_16 [1] : vector<16x32xf32> to vector<16xf32>
    %28 = vector.shape_cast %27 : vector<16xf32> to vector<16x1xf32>
    %29 = vector.broadcast %28 : vector<16x1xf32> to vector<16x32xf32>
    %30 = arith.divf %26, %29 : vector<16x32xf32>
    %c0_17 = arith.constant 0 : index
    %c0_18 = arith.constant 0 : index
    %31 = vector.load %arg8[%c0_17, %c0_18] : memref<16x32xf32, #tpu.memory_space<vmem>>, vector<16x32xf32>
    tpu.vector_store %arg8[%c0_17, %c0_18], %30 {strides = array<i32>} : memref<16x32xf32, #tpu.memory_space<vmem>>, vector<16x32xf32>,
    return
  }
  func.func @transform_0(%arg0: i32) -> (i32, i32) {
    %c0_i32 = arith.constant 0 : i32
    %c0_i32_0 = arith.constant 0 : i32
    return %arg0, %c0_i32 : i32, i32
  }
  func.func @transform_1(%arg0: i32) -> (i32, i32) {
    %c0_i32 = arith.constant 0 : i32
    %c0_i32_0 = arith.constant 0 : i32
    %c0_i32_1 = arith.constant 0 : i32
    return %c0_i32, %c0_i32_0 : i32, i32
  }
  func.func @transform_2(%arg0: i32) -> (i32, i32) {
    %c0_i32 = arith.constant 0 : i32
    %c0_i32_0 = arith.constant 0 : i32
    %c0_i32_1 = arith.constant 0 : i32
    return %c0_i32, %c0_i32_0 : i32, i32
  }
  func.func @transform_3(%arg0: i32) -> (i32, i32) {
    %c0_i32 = arith.constant 0 : i32
    %c0_i32_0 = arith.constant 0 : i32
    %c0_i32_1 = arith.constant 0 : i32
    return %c0_i32, %c0_i32_0 : i32, i32
  }
  func.func @transform_4(%arg0: i32) -> (i32, i32) {
    %c0_i32 = arith.constant 0 : i32
    %c0_i32_0 = arith.constant 0 : i32
    %c0_i32_1 = arith.constant 0 : i32
    return %c0_i32, %c0_i32_0 : i32, i32
  }
  func.func @transform_5(%arg0: i32) -> (i32, i32) {
    %c0_i32 = arith.constant 0 : i32
    %c0_i32_0 = arith.constant 0 : i32
    %c0_i32_1 = arith.constant 0 : i32
    return %c0_i32, %c0_i32_0 : i32, i32
  }
  func.func @transform_6(%arg0: i32) -> (i32, i32) {
    %c0_i32 = arith.constant 0 : i32
    %c0_i32_0 = arith.constant 0 : i32
    %c0_i32_1 = arith.constant 0 : i32
    return %c0_i32, %c0_i32_0 : i32, i32
  }
  func.func @transform_7(%arg0: i32) -> (i32, i32) {
    %c0_i32 = arith.constant 0 : i32
    %c0_i32_0 = arith.constant 0 : i32
    return %arg0, %c0_i32 : i32, i32
  }
}

</mosaic_0001>

<llo_original>
// kernel: tpu_custom_call.1
$region0: #{tpu_custom_call.1}
  #allocation0 [shape = 'u32[]', space=smem, size = 0x4, offset = 0x4, fixed_abs, tag = 'smem constant byte address 0x4 - core index']
  #allocation1 [shape = 'u32[144,128]{1,0:T(1,128)}', space=vmem, size = 0x12000, scoped, tag = 'internal scratch']
  %s0 = inlined_call_operand.vmem [shape: f32[16,784], index: 0, kind: input, shape index: {}]
  %s1 = inlined_call_operand.hbm [shape: bf16[784,128], index: 1, kind: input, shape index: {}]
  %s2 = inlined_call_operand.vmem [shape: f32[1,128], index: 2, kind: input, shape index: {}]
  %s3 = inlined_call_operand.vmem [shape: bf16[128,64], index: 3, kind: input, shape index: {}]
  %s4 = inlined_call_operand.vmem [shape: f32[1,64], index: 4, kind: input, shape index: {}]
  %s5 = inlined_call_operand.vmem [shape: bf16[64,32], index: 5, kind: input, shape index: {}]
  %s6 = inlined_call_operand.vmem [shape: f32[1,32], index: 6, kind: input, shape index: {}]
  %s7 = inlined_call_operand.hbm [shape: f32[16,32], index: 7, kind: output, shape index: {}]
  %s8 = sld [smem:[#allocation0]]
  $region42: #{tpu_custom_call.1} parent=0
    _
  %s10 = ssub.s32 1, %s8
  %s11 = scalar_select 0, %s10, %s8
  $region1: #{tpu_custom_call.1} parent=0
    #allocation2 [shape = 'u8[200704]{0}', space=vmem, size = 0x31000, scoped, tag = 'input window, operand 1, single buffered']
    #allocation3 [shape = 's32[1]{0}', space=sflag, size = 0x4, scoped, tag = 'scoped memory for tpu_custom_call.1']
    #allocation4 [shape = 's32[1]{0}', space=sflag, size = 0x4, scoped, tag = 'scoped memory for tpu_custom_call.1']
    #allocation5 [shape = 'u8[8192]{0}', space=vmem, size = 0x2000, scoped, tag = 'output window, operand 0, single buffered']
    %12 = vsyncpa [#allocation3], 0
    %13 = vsyncpa [#allocation4], 0
    // Predicated region
    $region2: #{tpu_custom_call.1} parent=1 // pred_check
      _
    $region3: #{tpu_custom_call.1} parent=1 // pred_check_branch
      %15 = sbr.rel (0) target = $region5
    $region4: #{tpu_custom_call.1} parent=1 // pred_region
      _
    $region5: #{tpu_custom_call.1} parent=1 // pred_fallthru
      _
    // Predicated region
    $region6: #{tpu_custom_call.1} parent=1 // pred_check
      _
    $region7: #{tpu_custom_call.1} parent=1 // pred_check_branch
      %17 = sbr.rel (0) target = $region9
    $region8: #{tpu_custom_call.1} parent=1 // pred_region
      %s19 = ssub.s32 6272, 6272
      %20 = vsyncadd [#allocation3], %s19
      %s21 = sshll.u32 [#allocation2], 4
      %s22 = int_to_ptr.vmem [resolvable:$true] %s21
      %27 = dma.hbm_to_vmem [thread:$0]  %s1, 6272, %s22, [#allocation3], 64, 64, 4
    $region9: #{tpu_custom_call.1} parent=1 // pred_fallthru
      _
    // Predicated region
    $region10: #{tpu_custom_call.1} parent=1 // pred_check
      _
    $region11: #{tpu_custom_call.1} parent=1 // pred_check_branch
      %29 = sbr.rel (0) target = $region13
    $region12: #{tpu_custom_call.1} parent=1 // pred_region
      _
    $region13: #{tpu_custom_call.1} parent=1 // pred_fallthru
      _
    // Predicated region
    $region14: #{tpu_custom_call.1} parent=1 // pred_check
      _
    $region15: #{tpu_custom_call.1} parent=1 // pred_check_branch
      %31 = sbr.rel (0) target = $region17
    $region16: #{tpu_custom_call.1} parent=1 // pred_region
      _
    $region17: #{tpu_custom_call.1} parent=1 // pred_fallthru
      _
    // Predicated region
    $region18: #{tpu_custom_call.1} parent=1 // pred_check
      _
    $region19: #{tpu_custom_call.1} parent=1 // pred_check_branch
      %33 = sbr.rel (0) target = $region21
    $region20: #{tpu_custom_call.1} parent=1 // pred_region
      _
    $region21: #{tpu_custom_call.1} parent=1 // pred_fallthru
      _
    // Predicated region
    $region22: #{tpu_custom_call.1} parent=1 // pred_check
      _
    $region23: #{tpu_custom_call.1} parent=1 // pred_check_branch
      %35 = sbr.rel (0) target = $region25
    $region24: #{tpu_custom_call.1} parent=1 // pred_region
      _
    $region25: #{tpu_custom_call.1} parent=1 // pred_fallthru
      _
    // Predicated region
    $region26: #{tpu_custom_call.1} parent=1 // pred_check
      _
    $region27: #{tpu_custom_call.1} parent=1 // pred_check_branch
      %37 = sbr.rel (0) target = $region29
    $region28: #{tpu_custom_call.1} parent=1 // pred_region
      _
    $region29: #{tpu_custom_call.1} parent=1 // pred_fallthru
      _
    // Predicated region
    $region30: #{tpu_custom_call.1} parent=1 // pred_check
      _
    $region31: #{tpu_custom_call.1} parent=1 // pred_check_branch
      %39 = sbr.rel (0) target = $region33
    $region32: #{tpu_custom_call.1} parent=1 // pred_region
      %40 = dma.done [#allocation3], 6272
    $region33: #{tpu_custom_call.1} parent=1 // pred_fallthru
      _
    %v42 = vld [vmem:[%s0] sm:$0xff]
    %v43 = vld [vmem:[%s0 + $0x8] sm:$0xff]
    %v44 = vld [vmem:[%s0 + $0x10] sm:$0xff]
    %v45 = vld [vmem:[%s0 + $0x18] sm:$0xff]
    %v46 = vld [vmem:[%s0 + $0x20] sm:$0xff]
    %v47 = vld [vmem:[%s0 + $0x28] sm:$0xff]
    %v48 = vld [vmem:[%s0 + $0x30] sm:$0xff]
    %v49 = vld [vmem:[%s0 + $0x38] sm:$0xff]
    %v50 = vld [vmem:[%s0 + $0x40] sm:$0xff]
    %v51 = vld [vmem:[%s0 + $0x48] sm:$0xff]
    %v52 = vld [vmem:[%s0 + $0x50] sm:$0xff]
    %v53 = vld [vmem:[%s0 + $0x58] sm:$0xff]
    %v54 = vld [vmem:[%s0 + $0x60] sm:$0xff]
    %v55 = vld [vmem:[%s0 + $0x68] sm:$0xff]
    %v56 = vpack.c.bf16 %v49, %v42
    %v57 = vpack.c.bf16 %v50, %v43
    %v58 = vpack.c.bf16 %v51, %v44
    %v59 = vpack.c.bf16 %v52, %v45
    %v60 = vpack.c.bf16 %v53, %v46
    %v61 = vpack.c.bf16 %v54, %v47
    %v62 = vpack.c.bf16 %v55, %v48
    %v63 = vld [vmem:[#allocation2] sm:$0xf]
    %v64 = vld [vmem:[#allocation2 + $0x4] sm:$0xf]
    %v65 = vld [vmem:[#allocation2 + $0x8] sm:$0xf]
    %v66 = vld [vmem:[#allocation2 + $0xc] sm:$0xf]
    %v67 = vld [vmem:[#allocation2 + $0x10] sm:$0xf]
    %v68 = vld [vmem:[#allocation2 + $0x14] sm:$0xf]
    %v69 = vld [vmem:[#allocation2 + $0x18] sm:$0xf]
    %v70 = vld [vmem:[#allocation2 + $0x1c] sm:$0xf]
    %v71 = vld [vmem:[#allocation2 + $0x20] sm:$0xf]
    %v72 = vld [vmem:[#allocation2 + $0x24] sm:$0xf]
    %v73 = vld [vmem:[#allocation2 + $0x28] sm:$0xf]
    %v74 = vld [vmem:[#allocation2 + $0x2c] sm:$0xf]
    %v75 = vld [vmem:[#allocation2 + $0x30] sm:$0xf]
    %v76 = vld [vmem:[#allocation2 + $0x34] sm:$0xf]
    %v77 = vld [vmem:[#allocation2 + $0x38] sm:$0xf]
    %v78 = vld [vmem:[#allocation2 + $0x3c] sm:$0xf]
    %v79 = vld [vmem:[#allocation2 + $0x40] sm:$0xf]
    %v80 = vld [vmem:[#allocation2 + $0x44] sm:$0xf]
    %v81 = vld [vmem:[#allocation2 + $0x48] sm:$0xf]
    %v82 = vld [vmem:[#allocation2 + $0x4c] sm:$0xf]
    %v83 = vld [vmem:[#allocation2 + $0x50] sm:$0xf]
    %v84 = vld [vmem:[#allocation2 + $0x54] sm:$0xf]
    %v85 = vld [vmem:[#allocation2 + $0x58] sm:$0xf]
    %v86 = vld [vmem:[#allocation2 + $0x5c] sm:$0xf]
    %v87 = vld [vmem:[#allocation2 + $0x60] sm:$0xf]
    %v88 = vld [vmem:[#allocation2 + $0x64] sm:$0xf]
    %v89 = vld [vmem:[#allocation2 + $0x68] sm:$0xf]
    %v90 = vld [vmem:[#allocation2 + $0x6c] sm:$0xf]
    %v91 = vld [vmem:[#allocation2 + $0x70] sm:$0xf]
    %v92 = vld [vmem:[#allocation2 + $0x74] sm:$0xf]
    %v93 = vld [vmem:[#allocation2 + $0x78] sm:$0xf]
    %v94 = vld [vmem:[#allocation2 + $0x7c] sm:$0xf]
    %v95 = vld [vmem:[#allocation2 + $0x80] sm:$0xf]
    %v96 = vld [vmem:[#allocation2 + $0x84] sm:$0xf]
    %v97 = vld [vmem:[#allocation2 + $0x88] sm:$0xf]
    %v98 = vld [vmem:[#allocation2 + $0x8c] sm:$0xf]
    %v99 = vld [vmem:[#allocation2 + $0x90] sm:$0xf]
    %v100 = vld [vmem:[#allocation2 + $0x94] sm:$0xf]
    %v101 = vld [vmem:[#allocation2 + $0x98] sm:$0xf]
    %v102 = vld [vmem:[#allocation2 + $0x9c] sm:$0xf]
    %v103 = vld [vmem:[#allocation2 + $0xa0] sm:$0xf]
    %v104 = vld [vmem:[#allocation2 + $0xa4] sm:$0xf]
    %v105 = vld [vmem:[#allocation2 + $0xa8] sm:$0xf]
    %v106 = vld [vmem:[#allocation2 + $0xac] sm:$0xf]
    %v107 = vld [vmem:[#allocation2 + $0xb0] sm:$0xf]
    %v108 = vld [vmem:[#allocation2 + $0xb4] sm:$0xf]
    %v109 = vld [vmem:[#allocation2 + $0xb8] sm:$0xf]
    %v110 = vld [vmem:[#allocation2 + $0xbc] sm:$0xf]
    %v111 = vld [vmem:[#allocation2 + $0xc0] sm:$0xf]
    %v112 = vld [vmem:[#allocation2 + $0xc4] sm:$0xf]
    %v113 = vld [vmem:[#allocation2 + $0xc8] sm:$0xf]
    %v114 = vld [vmem:[#allocation2 + $0xcc] sm:$0xf]
    %v115 = vld [vmem:[#allocation2 + $0xd0] sm:$0xf]
    %v116 = vld [vmem:[#allocation2 + $0xd4] sm:$0xf]
    %v117 = vld [vmem:[#allocation2 + $0xd8] sm:$0xf]
    %v118 = vld [vmem:[#allocation2 + $0xdc] sm:$0xf]
    %v119 = vld [vmem:[#allocation2 + $0xe0] sm:$0xf]
    %v120 = vld [vmem:[#allocation2 + $0xe4] sm:$0xf]
    %v121 = vld [vmem:[#allocation2 + $0xe8] sm:$0xf]
    %v122 = vld [vmem:[#allocation2 + $0xec] sm:$0xf]
    %v123 = vld [vmem:[#allocation2 + $0xf0] sm:$0xf]
    %v124 = vld [vmem:[#allocation2 + $0xf4] sm:$0xf]
    %v125 = vld [vmem:[#allocation2 + $0xf8] sm:$0xf]
    %v126 = vld [vmem:[#allocation2 + $0xfc] sm:$0xf]
    %v127 = vld [vmem:[#allocation2 + $0x100] sm:$0xf]
    %v128 = vld [vmem:[#allocation2 + $0x104] sm:$0xf]
    %v129 = vld [vmem:[#allocation2 + $0x108] sm:$0xf]
    %v130 = vld [vmem:[#allocation2 + $0x10c] sm:$0xf]
    %v131 = vld [vmem:[#allocation2 + $0x110] sm:$0xf]
    %v132 = vld [vmem:[#allocation2 + $0x114] sm:$0xf]
    %v133 = vld [vmem:[#allocation2 + $0x118] sm:$0xf]
    %v134 = vld [vmem:[#allocation2 + $0x11c] sm:$0xf]
    %v135 = vld [vmem:[#allocation2 + $0x120] sm:$0xf]
    %v136 = vld [vmem:[#allocation2 + $0x124] sm:$0xf]
    %v137 = vld [vmem:[#allocation2 + $0x128] sm:$0xf]
    %v138 = vld [vmem:[#allocation2 + $0x12c] sm:$0xf]
    %v139 = vld [vmem:[#allocation2 + $0x130] sm:$0xf]
    %v140 = vld [vmem:[#allocation2 + $0x134] sm:$0xf]
    %v141 = vld [vmem:[#allocation2 + $0x138] sm:$0xf]
    %v142 = vld [vmem:[#allocation2 + $0x13c] sm:$0xf]
    %v143 = vld [vmem:[#allocation2 + $0x140] sm:$0xf]
    %v144 = vld [vmem:[#allocation2 + $0x144] sm:$0xf]
    %v145 = vld [vmem:[#allocation2 + $0x148] sm:$0xf]
    %v146 = vld [vmem:[#allocation2 + $0x14c] sm:$0xf]
    %v147 = vld [vmem:[#allocation2 + $0x150] sm:$0xf]
    %v148 = vld [vmem:[#allocation2 + $0x154] sm:$0xf]
    %v149 = vld [vmem:[#allocation2 + $0x158] sm:$0xf]
    %v150 = vld [vmem:[#allocation2 + $0x15c] sm:$0xf]
    %v151 = vld [vmem:[#allocation2 + $0x160] sm:$0xf]
    %v152 = vld [vmem:[#allocation2 + $0x164] sm:$0xf]
    %v153 = vld [vmem:[#allocation2 + $0x168] sm:$0xf]
    %v154 = vld [vmem:[#allocation2 + $0x16c] sm:$0xf]
    %v155 = vld [vmem:[#allocation2 + $0x170] sm:$0xf]
    %v156 = vld [vmem:[#allocation2 + $0x174] sm:$0xf]
    %v157 = vld [vmem:[#allocation2 + $0x178] sm:$0xf]
    %v158 = vld [vmem:[#allocation2 + $0x17c] sm:$0xf]
    %v159 = vld [vmem:[#allocation2 + $0x180] sm:$0xf]
    %v160 = vld [vmem:[#allocation2 + $0x184] sm:$0xf]
    %v161 = vld [vmem:[%s2] sm:$0x1]
    %v163 = vlaneseq
    %v164 = vshrl.u32 %v163, 7
    %v165 = vsub.s32 0, %v164
    %v166 = vrot.slane %v161, %v165
    %v266 = vunpack.c.l.b16 %v63
    %v267 = vunpack.c.l.b16 %v64
    %v268 = vunpack.c.l.b16 %v65
    %v269 = vunpack.c.l.b16 %v66
    %v270 = vunpack.c.l.b16 %v67
    %v271 = vunpack.c.l.b16 %v68
    %v272 = vunpack.c.l.b16 %v69
    %v273 = vunpack.c.l.b16 %v70
    %v274 = vunpack.c.l.b16 %v71
    %v275 = vunpack.c.l.b16 %v72
    %v276 = vunpack.c.l.b16 %v73
    %v277 = vunpack.c.l.b16 %v74
    %v278 = vunpack.c.l.b16 %v75
    %v279 = vunpack.c.l.b16 %v76
    %v280 = vunpack.c.l.b16 %v77
    %v281 = vunpack.c.l.b16 %v78
    %v282 = vunpack.c.l.b16 %v79
    %v283 = vunpack.c.l.b16 %v80
    %v284 = vunpack.c.l.b16 %v81
    %v285 = vunpack.c.l.b16 %v82
    %v286 = vunpack.c.l.b16 %v83
    %v287 = vunpack.c.l.b16 %v84
    %v288 = vunpack.c.l.b16 %v85
    %v289 = vunpack.c.l.b16 %v86
    %v290 = vunpack.c.l.b16 %v87
    %v291 = vunpack.c.l.b16 %v88
    %v292 = vunpack.c.l.b16 %v89
    %v293 = vunpack.c.l.b16 %v90
    %v294 = vunpack.c.l.b16 %v91
    %v295 = vunpack.c.l.b16 %v92
    %v296 = vunpack.c.l.b16 %v93
    %v297 = vunpack.c.l.b16 %v94
    %v298 = vunpack.c.l.b16 %v95
    %v299 = vunpack.c.l.b16 %v96
    %v300 = vunpack.c.l.b16 %v97
    %v301 = vunpack.c.l.b16 %v98
    %v302 = vunpack.c.l.b16 %v99
    %v303 = vunpack.c.l.b16 %v100
    %v304 = vunpack.c.l.b16 %v101
    %v305 = vunpack.c.l.b16 %v102
    %v306 = vunpack.c.l.b16 %v103
    %v307 = vunpack.c.l.b16 %v104
    %v308 = vunpack.c.l.b16 %v105
    %v309 = vunpack.c.l.b16 %v106
    %v310 = vunpack.c.l.b16 %v107
    %v311 = vunpack.c.l.b16 %v108
    %v312 = vunpack.c.l.b16 %v109
    %v313 = vunpack.c.l.b16 %v110
    %v314 = vunpack.c.l.b16 %v111
    %v315 = vunpack.c.l.b16 %v112
    %v316 = vunpack.c.l.b16 %v113
    %v317 = vunpack.c.l.b16 %v114
    %v318 = vunpack.c.l.b16 %v115
    %v319 = vunpack.c.l.b16 %v116
    %v320 = vunpack.c.l.b16 %v117
    %v321 = vunpack.c.l.b16 %v118
    %v322 = vunpack.c.l.b16 %v119
    %v323 = vunpack.c.l.b16 %v120
    %v324 = vunpack.c.l.b16 %v121
    %v325 = vunpack.c.l.b16 %v122
    %v326 = vunpack.c.l.b16 %v123
    %v327 = vunpack.c.l.b16 %v124
    %v328 = vunpack.c.l.b16 %v125
    %v329 = vunpack.c.l.b16 %v126
    %v330 = vunpack.c.l.b16 %v127
    %v331 = vunpack.c.l.b16 %v128
    %v332 = vunpack.c.l.b16 %v129
    %v333 = vunpack.c.l.b16 %v130
    %v334 = vunpack.c.l.b16 %v131
    %v335 = vunpack.c.l.b16 %v132
    %v336 = vunpack.c.l.b16 %v133
    %v337 = vunpack.c.l.b16 %v134
    %v338 = vunpack.c.l.b16 %v135
    %v339 = vunpack.c.l.b16 %v136
    %v340 = vunpack.c.l.b16 %v137
    %v341 = vunpack.c.l.b16 %v138
    %v342 = vunpack.c.l.b16 %v139
    %v343 = vunpack.c.l.b16 %v140
    %v344 = vunpack.c.l.b16 %v141
    %v345 = vunpack.c.l.b16 %v142
    %v346 = vunpack.c.l.b16 %v143
    %v347 = vunpack.c.l.b16 %v144
    %v348 = vunpack.c.l.b16 %v145
    %v349 = vunpack.c.l.b16 %v146
    %v350 = vunpack.c.l.b16 %v147
    %v351 = vunpack.c.l.b16 %v148
    %v352 = vunpack.c.l.b16 %v149
    %v353 = vunpack.c.l.b16 %v150
    %v354 = vunpack.c.l.b16 %v151
    %v355 = vunpack.c.l.b16 %v152
    %v356 = vunpack.c.l.b16 %v153
    %v357 = vunpack.c.l.b16 %v154
    %v358 = vunpack.c.l.b16 %v155
    %v359 = vunpack.c.l.b16 %v156
    %v360 = vunpack.c.l.b16 %v157
    %v361 = vunpack.c.l.b16 %v158
    %v362 = vunpack.c.l.b16 %v159
    %v363 = vunpack.c.l.b16 %v160
    %v364 = vpack.c.b16 %v267, %v266
    %v365 = vpack.c.b16 %v269, %v268
    %v366 = vpack.c.b16 %v271, %v270
    %v367 = vpack.c.b16 %v273, %v272
    %v368 = vpack.c.b16 %v275, %v274
    %v369 = vpack.c.b16 %v277, %v276
    %v370 = vpack.c.b16 %v279, %v278
    %v371 = vpack.c.b16 %v281, %v280
    %v372 = vpack.c.b16 %v283, %v282
    %v373 = vpack.c.b16 %v285, %v284
    %v374 = vpack.c.b16 %v287, %v286
    %v375 = vpack.c.b16 %v289, %v288
    %v376 = vpack.c.b16 %v291, %v290
    %v377 = vpack.c.b16 %v293, %v292
    %v378 = vpack.c.b16 %v295, %v294
    %v379 = vpack.c.b16 %v297, %v296
    %v380 = vpack.c.b16 %v299, %v298
    %v381 = vpack.c.b16 %v301, %v300
    %v382 = vpack.c.b16 %v303, %v302
    %v383 = vpack.c.b16 %v305, %v304
    %v384 = vpack.c.b16 %v307, %v306
    %v385 = vpack.c.b16 %v309, %v308
    %v386 = vpack.c.b16 %v311, %v310
    %v387 = vpack.c.b16 %v313, %v312
    %v388 = vpack.c.b16 %v315, %v314
    %v389 = vpack.c.b16 %v317, %v316
    %v390 = vpack.c.b16 %v319, %v318
    %v391 = vpack.c.b16 %v321, %v320
    %v392 = vpack.c.b16 %v323, %v322
    %v393 = vpack.c.b16 %v325, %v324
    %v394 = vpack.c.b16 %v327, %v326
    %v395 = vpack.c.b16 %v329, %v328
    %v396 = vpack.c.b16 %v331, %v330
    %v397 = vpack.c.b16 %v333, %v332
    %v398 = vpack.c.b16 %v335, %v334
    %v399 = vpack.c.b16 %v337, %v336
    %v400 = vpack.c.b16 %v339, %v338
    %v401 = vpack.c.b16 %v341, %v340
    %v402 = vpack.c.b16 %v343, %v342
    %v403 = vpack.c.b16 %v345, %v344
    %v404 = vpack.c.b16 %v347, %v346
    %v405 = vpack.c.b16 %v349, %v348
    %v406 = vpack.c.b16 %v351, %v350
    %v407 = vpack.c.b16 %v353, %v352
    %v408 = vpack.c.b16 %v355, %v354
    %v409 = vpack.c.b16 %v357, %v356
    %v410 = vpack.c.b16 %v359, %v358
    %v411 = vpack.c.b16 %v361, %v360
    %v412 = vpack.c.b16 %v363, %v362
    %vm462 = vcmask 130048
    %v464 = vsel %vm462, %v62, 0
    %466 = vmatprep.subr.bf16.mxu0 0
    %467 = vmatpush1.bf16.msra.mxu0 %v364
    %468 = vmatprep.subr.bf16.mxu0 0
    %469 = vmatpush1.bf16.msra.mxu0 %v365
    %470 = vmatprep.subr.bf16.mxu0 0
    %471 = vmatpush1.bf16.msra.mxu0 %v366
    %472 = vmatprep.subr.bf16.mxu0 0
    %473 = vmatpush1.bf16.msra.mxu0 %v367
    %474 = vmatprep.subr.bf16.mxu0 0
    %475 = vmatpush1.bf16.msra.mxu0 %v368
    %476 = vmatprep.subr.bf16.mxu0 0
    %477 = vmatpush1.bf16.msra.mxu0 %v369
    %478 = vmatprep.subr.bf16.mxu0 0
    %479 = vmatpush1.bf16.msra.mxu0 %v370
    %480 = vmatprep.subr.bf16.mxu0 0
    %481 = vmatpush1.bf16.msra.mxu0 %v371
    %482 = vmatprep.subr.bf16.mxu0 0
    %483 = vmatpush1.bf16.msra.mxu0 %v372
    %484 = vmatprep.subr.bf16.mxu0 0
    %485 = vmatpush1.bf16.msra.mxu0 %v373
    %486 = vmatprep.subr.bf16.mxu0 0
    %487 = vmatpush1.bf16.msra.mxu0 %v374
    %488 = vmatprep.subr.bf16.mxu0 0
    %489 = vmatpush1.bf16.msra.mxu0 %v375
    %490 = vmatprep.subr.bf16.mxu0 0
    %491 = vmatpush1.bf16.msra.mxu0 %v376
    %492 = vmatprep.subr.bf16.mxu0 0
    %493 = vmatpush1.bf16.msra.mxu0 %v377
    %494 = vmatprep.subr.bf16.mxu0 0
    %495 = vmatpush1.bf16.msra.mxu0 %v378
    %496 = vmatprep.subr.bf16.mxu0 0
    %497 = vmatpush1.bf16.msra.mxu0 %v379
    %498 = vmatprep.mubr.bf16.mxu0 %v57
    %499 = vmatmul.mubr.bf16.gmra.mrb[0].mxu0 %v56
    %v500 = vpop.f32.mrb[0].mxu0
    %v501 = vadd.f32 %v166, %v500
    %v502 = vpop.f32.mrb[0].mxu0
    %v503 = vpop.f32.mrb[0].mxu0
    %v504 = vadd.f32 %v166, %v503
    %v505 = vpop.f32.mrb[0].mxu0
    %506 = vdwg.mxu0
    %507 = vmatprep.subr.bf16.mxu0 0
    %508 = vmatpush1.bf16.msra.mxu0 %v380
    %509 = vmatprep.subr.bf16.mxu0 0
    %510 = vmatpush1.bf16.msra.mxu0 %v381
    %511 = vmatprep.subr.bf16.mxu0 0
    %512 = vmatpush1.bf16.msra.mxu0 %v382
    %513 = vmatprep.subr.bf16.mxu0 0
    %514 = vmatpush1.bf16.msra.mxu0 %v383
    %515 = vmatprep.subr.bf16.mxu0 0
    %516 = vmatpush1.bf16.msra.mxu0 %v384
    %517 = vmatprep.subr.bf16.mxu0 0
    %518 = vmatpush1.bf16.msra.mxu0 %v385
    %519 = vmatprep.subr.bf16.mxu0 0
    %520 = vmatpush1.bf16.msra.mxu0 %v386
    %521 = vmatprep.subr.bf16.mxu0 0
    %522 = vmatpush1.bf16.msra.mxu0 %v387
    %523 = vmatprep.subr.bf16.mxu0 0
    %524 = vmatpush1.bf16.msra.mxu0 %v388
    %525 = vmatprep.subr.bf16.mxu0 0
    %526 = vmatpush1.bf16.msra.mxu0 %v389
    %527 = vmatprep.subr.bf16.mxu0 0
    %528 = vmatpush1.bf16.msra.mxu0 %v390
    %529 = vmatprep.subr.bf16.mxu0 0
    %530 = vmatpush1.bf16.msra.mxu0 %v391
    %531 = vmatprep.subr.bf16.mxu0 0
    %532 = vmatpush1.bf16.msra.mxu0 %v392
    %533 = vmatprep.subr.bf16.mxu0 0
    %534 = vmatpush1.bf16.msra.mxu0 %v393
    %535 = vmatprep.subr.bf16.mxu0 0
    %536 = vmatpush1.bf16.msra.mxu0 %v394
    %537 = vmatprep.subr.bf16.mxu0 0
    %538 = vmatpush1.bf16.msra.mxu0 %v395
    %539 = vmatprep.mubr.bf16.mxu0 %v59
    %540 = vmatmul.mubr.bf16.gmra.mrb[0].mxu0 %v58
    %v541 = vpop.f32.mrb[0].mxu0
    %v542 = vadd.f32 %v501, %v541
    %v543 = vpop.f32.mrb[0].mxu0
    %v544 = vpop.f32.mrb[0].mxu0
    %v545 = vadd.f32 %v504, %v544
    %v546 = vpop.f32.mrb[0].mxu0
    %547 = vdwg.mxu0
    %548 = vmatprep.subr.bf16.mxu0 0
    %549 = vmatpush1.bf16.msra.mxu0 %v396
    %550 = vmatprep.subr.bf16.mxu0 0
    %551 = vmatpush1.bf16.msra.mxu0 %v397
    %552 = vmatprep.subr.bf16.mxu0 0
    %553 = vmatpush1.bf16.msra.mxu0 %v398
    %554 = vmatprep.subr.bf16.mxu0 0
    %555 = vmatpush1.bf16.msra.mxu0 %v399
    %556 = vmatprep.subr.bf16.mxu0 0
    %557 = vmatpush1.bf16.msra.mxu0 %v400
    %558 = vmatprep.subr.bf16.mxu0 0
    %559 = vmatpush1.bf16.msra.mxu0 %v401
    %560 = vmatprep.subr.bf16.mxu0 0
    %561 = vmatpush1.bf16.msra.mxu0 %v402
    %562 = vmatprep.subr.bf16.mxu0 0
    %563 = vmatpush1.bf16.msra.mxu0 %v403
    %564 = vmatprep.subr.bf16.mxu0 0
    %565 = vmatpush1.bf16.msra.mxu0 %v404
    %566 = vmatprep.subr.bf16.mxu0 0
    %567 = vmatpush1.bf16.msra.mxu0 %v405
    %568 = vmatprep.subr.bf16.mxu0 0
    %569 = vmatpush1.bf16.msra.mxu0 %v406
    %570 = vmatprep.subr.bf16.mxu0 0
    %571 = vmatpush1.bf16.msra.mxu0 %v407
    %572 = vmatprep.subr.bf16.mxu0 0
    %573 = vmatpush1.bf16.msra.mxu0 %v408
    %574 = vmatprep.subr.bf16.mxu0 0
    %575 = vmatpush1.bf16.msra.mxu0 %v409
    %576 = vmatprep.subr.bf16.mxu0 0
    %577 = vmatpush1.bf16.msra.mxu0 %v410
    %578 = vmatprep.subr.bf16.mxu0 0
    %579 = vmatpush1.bf16.msra.mxu0 %v411
    %580 = vmatprep.mubr.bf16.mxu0 %v61
    %581 = vmatmul.mubr.bf16.gmra.mrb[0].mxu0 %v60
    %v582 = vpop.f32.mrb[0].mxu0
    %v583 = vadd.f32 %v542, %v582
    %v584 = vpop.f32.mrb[0].mxu0
    %v585 = vpop.f32.mrb[0].mxu0
    %v586 = vadd.f32 %v545, %v585
    %v587 = vpop.f32.mrb[0].mxu0
    %588 = vdwg.mxu0
    %589 = vmatprep.subr.bf16.mxu0 0
    %590 = vmatpush1.bf16.msra.mxu0 %v412
    %591 = vmatprep.subr.bf16.mxu0 0
    %592 = vmatpush1.bf16.msra.mxu0 0
    %593 = vmatprep.subr.bf16.mxu0 0
    %594 = vmatpush1.bf16.msra.mxu0 0
    %595 = vmatprep.subr.bf16.mxu0 0
    %596 = vmatpush1.bf16.msra.mxu0 0
    %597 = vmatprep.subr.bf16.mxu0 0
    %598 = vmatpush1.bf16.msra.mxu0 0
    %599 = vmatprep.subr.bf16.mxu0 0
    %600 = vmatpush1.bf16.msra.mxu0 0
    %601 = vmatprep.subr.bf16.mxu0 0
    %602 = vmatpush1.bf16.msra.mxu0 0
    %603 = vmatprep.subr.bf16.mxu0 0
    %604 = vmatpush1.bf16.msra.mxu0 0
    %605 = vmatprep.subr.bf16.mxu0 0
    %606 = vmatpush1.bf16.msra.mxu0 0
    %607 = vmatprep.subr.bf16.mxu0 0
    %608 = vmatpush1.bf16.msra.mxu0 0
    %609 = vmatprep.subr.bf16.mxu0 0
    %610 = vmatpush1.bf16.msra.mxu0 0
    %611 = vmatprep.subr.bf16.mxu0 0
    %612 = vmatpush1.bf16.msra.mxu0 0
    %613 = vmatprep.subr.bf16.mxu0 0
    %614 = vmatpush1.bf16.msra.mxu0 0
    %615 = vmatprep.subr.bf16.mxu0 0
    %616 = vmatpush1.bf16.msra.mxu0 0
    %617 = vmatprep.subr.bf16.mxu0 0
    %618 = vmatpush1.bf16.msra.mxu0 0
    %619 = vmatprep.subr.bf16.mxu0 0
    %620 = vmatpush1.bf16.msra.mxu0 0
    %621 = vmatprep.mubr.bf16.mxu0 0
    %622 = vmatmul.mubr.bf16.gmra.mrb[0].mxu0 %v464
    %v623 = vpop.f32.mrb[0].mxu0
    %v624 = vadd.f32 %v583, %v623
    %v625 = vpop.f32.mrb[0].mxu0
    %v626 = vpop.f32.mrb[0].mxu0
    %v627 = vadd.f32 %v586, %v626
    %v628 = vpop.f32.mrb[0].mxu0
    %629 = vdwg.mxu0
    %v630 = vtanh.pop %v624
    %v631 = vtanh.pop %v627
    %v632 = vpack.c.bf16 %v631, %v630
    %v633 = vld [vmem:[%s3] sm:$0xf]
    %v634 = vld [vmem:[%s3 + $0x4] sm:$0xf]
    %v635 = vld [vmem:[%s3 + $0x8] sm:$0xf]
    %v636 = vld [vmem:[%s3 + $0xc] sm:$0xf]
    %v637 = vld [vmem:[%s3 + $0x10] sm:$0xf]
    %v638 = vld [vmem:[%s3 + $0x14] sm:$0xf]
    %v639 = vld [vmem:[%s3 + $0x18] sm:$0xf]
    %v640 = vld [vmem:[%s3 + $0x1c] sm:$0xf]
    %v641 = vld [vmem:[%s3 + $0x20] sm:$0xf]
    %v642 = vld [vmem:[%s3 + $0x24] sm:$0xf]
    %v643 = vld [vmem:[%s3 + $0x28] sm:$0xf]
    %v644 = vld [vmem:[%s3 + $0x2c] sm:$0xf]
    %v645 = vld [vmem:[%s3 + $0x30] sm:$0xf]
    %v646 = vld [vmem:[%s3 + $0x34] sm:$0xf]
    %v647 = vld [vmem:[%s3 + $0x38] sm:$0xf]
    %v648 = vld [vmem:[%s3 + $0x3c] sm:$0xf]
    %v649 = vld [vmem:[%s4] sm:$0x1]
    %v651 = vlaneseq
    %v652 = vshrl.u32 %v651, 7
    %v653 = vsub.s32 0, %v652
    %v654 = vrot.slane %v649, %v653
    %v672 = vunpack.c.l.b16 %v633
    %v673 = vunpack.c.l.b16 %v634
    %v674 = vunpack.c.l.b16 %v635
    %v675 = vunpack.c.l.b16 %v636
    %v676 = vunpack.c.l.b16 %v637
    %v677 = vunpack.c.l.b16 %v638
    %v678 = vunpack.c.l.b16 %v639
    %v679 = vunpack.c.l.b16 %v640
    %v680 = vunpack.c.l.b16 %v641
    %v681 = vunpack.c.l.b16 %v642
    %v682 = vunpack.c.l.b16 %v643
    %v683 = vunpack.c.l.b16 %v644
    %v684 = vunpack.c.l.b16 %v645
    %v685 = vunpack.c.l.b16 %v646
    %v686 = vunpack.c.l.b16 %v647
    %v687 = vunpack.c.l.b16 %v648
    %v688 = vpack.c.b16 %v673, %v672
    %v689 = vpack.c.b16 %v675, %v674
    %v690 = vpack.c.b16 %v677, %v676
    %v691 = vpack.c.b16 %v679, %v678
    %v692 = vpack.c.b16 %v681, %v680
    %v693 = vpack.c.b16 %v683, %v682
    %v694 = vpack.c.b16 %v685, %v684
    %v695 = vpack.c.b16 %v687, %v686
    %704 = vmatprep.subr.bf16.mxu0 0
    %705 = vmatpush1.bf16.msra.mxu0 %v688
    %706 = vmatprep.subr.bf16.mxu0 0
    %707 = vmatpush1.bf16.msra.mxu0 %v689
    %708 = vmatprep.subr.bf16.mxu0 0
    %709 = vmatpush1.bf16.msra.mxu0 %v690
    %710 = vmatprep.subr.bf16.mxu0 0
    %711 = vmatpush1.bf16.msra.mxu0 %v691
    %712 = vmatprep.subr.bf16.mxu0 0
    %713 = vmatpush1.bf16.msra.mxu0 %v692
    %714 = vmatprep.subr.bf16.mxu0 0
    %715 = vmatpush1.bf16.msra.mxu0 %v693
    %716 = vmatprep.subr.bf16.mxu0 0
    %717 = vmatpush1.bf16.msra.mxu0 %v694
    %718 = vmatprep.subr.bf16.mxu0 0
    %719 = vmatpush1.bf16.msra.mxu0 %v695
    %720 = vmatprep.subr.bf16.mxu0 0
    %721 = vmatpush1.bf16.msra.mxu0 0
    %722 = vmatprep.subr.bf16.mxu0 0
    %723 = vmatpush1.bf16.msra.mxu0 0
    %724 = vmatprep.subr.bf16.mxu0 0
    %725 = vmatpush1.bf16.msra.mxu0 0
    %726 = vmatprep.subr.bf16.mxu0 0
    %727 = vmatpush1.bf16.msra.mxu0 0
    %728 = vmatprep.subr.bf16.mxu0 0
    %729 = vmatpush1.bf16.msra.mxu0 0
    %730 = vmatprep.subr.bf16.mxu0 0
    %731 = vmatpush1.bf16.msra.mxu0 0
    %732 = vmatprep.subr.bf16.mxu0 0
    %733 = vmatpush1.bf16.msra.mxu0 0
    %734 = vmatprep.subr.bf16.mxu0 0
    %735 = vmatpush1.bf16.msra.mxu0 0
    %736 = vmatprep.mubr.bf16.mxu0 0
    %737 = vmatmul.mubr.bf16.gmra.mrb[0].mxu0 %v632
    %v738 = vpop.f32.mrb[0].mxu0
    %v739 = vadd.f32 %v654, %v738
    %v740 = vpop.f32.mrb[0].mxu0
    %v741 = vpop.f32.mrb[0].mxu0
    %v742 = vadd.f32 %v654, %v741
    %v743 = vpop.f32.mrb[0].mxu0
    %744 = vdwg.mxu0
    %v745 = vtanh.pop %v739
    %v746 = vtanh.pop %v742
    %v747 = vpack.c.bf16 %v746, %v745
    %v748 = vld [vmem:[%s5] sm:$0xf]
    %v749 = vld [vmem:[%s5 + $0x4] sm:$0xf]
    %v750 = vld [vmem:[%s5 + $0x8] sm:$0xf]
    %v751 = vld [vmem:[%s5 + $0xc] sm:$0xf]
    %v752 = vld [vmem:[%s5 + $0x10] sm:$0xf]
    %v753 = vld [vmem:[%s5 + $0x14] sm:$0xf]
    %v754 = vld [vmem:[%s5 + $0x18] sm:$0xf]
    %v755 = vld [vmem:[%s5 + $0x1c] sm:$0xf]
    %v756 = vld [vmem:[%s6] sm:$0x1]
    %v758 = vlaneseq
    %v759 = vshrl.u32 %v758, 7
    %v760 = vsub.s32 0, %v759
    %v761 = vrot.slane %v756, %v760
    %v771 = vunpack.c.l.b16 %v748
    %v772 = vunpack.c.l.b16 %v749
    %v773 = vunpack.c.l.b16 %v750
    %v774 = vunpack.c.l.b16 %v751
    %v775 = vunpack.c.l.b16 %v752
    %v776 = vunpack.c.l.b16 %v753
    %v777 = vunpack.c.l.b16 %v754
    %v778 = vunpack.c.l.b16 %v755
    %v779 = vpack.c.b16 %v772, %v771
    %v780 = vpack.c.b16 %v774, %v773
    %v781 = vpack.c.b16 %v776, %v775
    %v782 = vpack.c.b16 %v778, %v777
    %vm787 = vcmask 523264
    %v789 = vsel %vm787, %v747, 0
    %791 = vmatprep.subr.bf16.mxu0 0
    %792 = vmatpush1.bf16.msra.mxu0 %v779
    %793 = vmatprep.subr.bf16.mxu0 0
    %794 = vmatpush1.bf16.msra.mxu0 %v780
    %795 = vmatprep.subr.bf16.mxu0 0
    %796 = vmatpush1.bf16.msra.mxu0 %v781
    %797 = vmatprep.subr.bf16.mxu0 0
    %798 = vmatpush1.bf16.msra.mxu0 %v782
    %799 = vmatprep.subr.bf16.mxu0 0
    %800 = vmatpush1.bf16.msra.mxu0 0
    %801 = vmatprep.subr.bf16.mxu0 0
    %802 = vmatpush1.bf16.msra.mxu0 0
    %803 = vmatprep.subr.bf16.mxu0 0
    %804 = vmatpush1.bf16.msra.mxu0 0
    %805 = vmatprep.subr.bf16.mxu0 0
    %806 = vmatpush1.bf16.msra.mxu0 0
    %807 = vmatprep.subr.bf16.mxu0 0
    %808 = vmatpush1.bf16.msra.mxu0 0
    %809 = vmatprep.subr.bf16.mxu0 0
    %810 = vmatpush1.bf16.msra.mxu0 0
    %811 = vmatprep.subr.bf16.mxu0 0
    %812 = vmatpush1.bf16.msra.mxu0 0
    %813 = vmatprep.subr.bf16.mxu0 0
    %814 = vmatpush1.bf16.msra.mxu0 0
    %815 = vmatprep.subr.bf16.mxu0 0
    %816 = vmatpush1.bf16.msra.mxu0 0
    %817 = vmatprep.subr.bf16.mxu0 0
    %818 = vmatpush1.bf16.msra.mxu0 0
    %819 = vmatprep.subr.bf16.mxu0 0
    %820 = vmatpush1.bf16.msra.mxu0 0
    %821 = vmatprep.subr.bf16.mxu0 0
    %822 = vmatpush1.bf16.msra.mxu0 0
    %823 = vmatprep.mubr.bf16.mxu0 0
    %824 = vmatmul.mubr.bf16.gmra.mrb[0].mxu0 %v789
    %v825 = vpop.f32.mrb[0].mxu0
    %v826 = vadd.f32 %v761, %v825
    %v827 = vpop.f32.mrb[0].mxu0
    %v828 = vpop.f32.mrb[0].mxu0
    %v829 = vadd.f32 %v761, %v828
    %v830 = vpop.f32.mrb[0].mxu0
    %831 = vdwg.mxu0
    %v832 = vtanh.pop %v826
    %v833 = vtanh.pop %v829
    %vm834 = vcmask 261120
    %v835 = vsel %vm834, %v832, -inf
    %836 = vmax.xlane.f32.xlu0 %v835
    %v837 = vpop.xlane.xlu0 %836
    %v838 = vsel %vm834, %v833, -inf
    %839 = vmax.xlane.f32.xlu0 %v838
    %v840 = vpop.xlane.xlu0 %839
    %v841 = vsub.f32 %v832, %v837
    %v842 = vsub.f32 %v833, %v840
    %v843 = vmul.f32 %v841, 1.442695
    %v844 = vpow.pop %v843
    %v845 = vmul.f32 %v842, 1.442695
    %v846 = vpow.pop %v845
    %v847 = vsel %vm834, %v844, 0.0
    %848 = vadd.xlane.f32.xlu0 %v847
    %v849 = vpop.xlane.xlu0 %848
    %v850 = vsel %vm834, %v846, 0.0
    %851 = vadd.xlane.f32.xlu0 %v850
    %v852 = vpop.xlane.xlu0 %851
    %v853 = vrcp.pop %v849
    %v854 = vmul.f32 %v844, %v853
    %v855 = vrcp.pop %v852
    %v856 = vmul.f32 %v846, %v855
    %857 = vst.msk [vmem:[#allocation5] sm:$0xff] %vm834, %v854
    %858 = vst.msk [vmem:[#allocation5 + $0x8] sm:$0xff] %vm834, %v856
    // Predicated region
    $region34: #{tpu_custom_call.1} parent=1 // pred_check
      _
    $region35: #{tpu_custom_call.1} parent=1 // pred_check_branch
      %860 = sbr.rel (0) target = $region37
    $region36: #{tpu_custom_call.1} parent=1 // pred_region
      %s862 = ssub.s32 256, 256
      %863 = vsyncadd [#allocation4], %s862
      %s864 = sshll.u32 [#allocation5], 4
      %s865 = int_to_ptr.vmem [resolvable:$true] %s864
      %870 = dma.vmem_to_hbm [thread:$0]  %s865, 256, %s7, [#allocation4], 128, 128, 8
    $region37: #{tpu_custom_call.1} parent=1 // pred_fallthru
      _
    // Predicated region
    $region38: #{tpu_custom_call.1} parent=1 // pred_check
      _
    $region39: #{tpu_custom_call.1} parent=1 // pred_check_branch
      %872 = sbr.rel (0) target = $region41
    $region40: #{tpu_custom_call.1} parent=1 // pred_region
      %873 = dma.done [#allocation4], 256
    $region41: #{tpu_custom_call.1} parent=1 // pred_fallthru
      _
    %874 = vsyncpa [#allocation3], 1
    %875 = vsyncpa [#allocation4], 1

</llo_original>
